<compile_context>
chip_gen: v7x
topology: tpu7x:2x2x1
jax: 0.10.0
libtpu: 0.0.40
codegen_flags: <defaults>
</compile_context>

<pallas_src>
import functools

import jax
import jax.numpy as jnp
from jax import lax
from jax.experimental import pallas as pl
from jax.experimental.pallas import tpu as pltpu


def _hash_u32(x, seed):
    """Cheap, well-mixed per-element integer hash (uint32 -> uint32)."""
    h = x * jnp.uint32(0x9E3779B1) + seed
    h = h ^ (h >> 16)
    h = h * jnp.uint32(0x7FEB352D)
    h = h ^ (h >> 15)
    h = h * jnp.uint32(0x846CA68B)
    h = h ^ (h >> 16)
    return h


def _flash_sdpa_dropout_kernel(seed_ref, scale_ref, q_ref, k_ref, v_ref, o_ref,
                               m_scr, l_scr, acc_scr, *, lq, lk):
    b = pl.program_id(0)
    qi = pl.program_id(1)
    ki = pl.program_id(2)

    @pl.when(ki == 0)
    def _init():
        m_scr[...] = jnp.full(m_scr.shape, -jnp.inf, dtype=m_scr.dtype)
        l_scr[...] = jnp.zeros(l_scr.shape, dtype=l_scr.dtype)
        acc_scr[...] = jnp.zeros(acc_scr.shape, dtype=acc_scr.dtype)

    # Fold scale_factor into the (bq, D) Q tile instead of the (bq, bk) scores.
    q = q_ref[...] * scale_ref[0].astype(q_ref.dtype)
    k = k_ref[...]

    # Q @ K^T expressed as a contraction on the feature dim (no XLU transpose).
    s = lax.dot_general(q, k, (((1,), (1,)), ((), ())),
                        preferred_element_type=jnp.float32)          # (bq, bk)

    # ---- online softmax update ---------------------------------------------
    m_prev = m_scr[...]
    m_new = jnp.maximum(m_prev, jnp.max(s, axis=-1, keepdims=True))
    alpha = jnp.exp(m_prev - m_new)
    p = jnp.exp(s - m_new)                                            # unnormalized
    l_scr[...] = alpha * l_scr[...] + jnp.sum(p, axis=-1, keepdims=True)

    # ---- dropout(p=0.5) keep mask, keyed by global (b, q, k) element id -----
    bq, bk = s.shape
    row = lax.broadcasted_iota(jnp.int32, (bq, bk), 0) + qi * bq
    col = lax.broadcasted_iota(jnp.int32, (bq, bk), 1) + ki * bk
    gid = ((b * lq + row) * lk + col).astype(jnp.uint32)
    h = _hash_u32(gid, seed_ref[0].astype(jnp.uint32))
    keep = (h & jnp.uint32(1)) == jnp.uint32(0)                       # P(keep)=0.5

    p_kept = jnp.where(keep, p, 0.0)

    # ---- accumulate (dropout(softmax)) @ V ----------------------------------
    v = v_ref[...]
    pv = lax.dot_general(p_kept.astype(v.dtype), v, (((1,), (0,)), ((), ())),
                         preferred_element_type=jnp.float32)          # (bq, Dv)
    acc_scr[...] = alpha * acc_scr[...] + pv
    m_scr[...] = m_new

    @pl.when(ki == pl.num_programs(2) - 1)
    def _finalize():
        # 2.0 = inverted-dropout rescale for p=0.5, folded into the per-row
        # softmax normalization (one tiny (bq,1) op instead of a (bq,bk) mul).
        o_ref[...] = (acc_scr[...] * (2.0 / l_scr[...])).astype(o_ref.dtype)


def _pick_block(n, preferred=128):
    if n <= preferred:
        return n
    if n % preferred == 0:
        return preferred
    # TODO(synk): masked tail handling for lengths not divisible by 128.
    return n


def model_forward(query, key, value, scale_factor, dropout_p=0.5, seed=0,
                  block_q=128, block_k=128):
    """Pallas implementation of Model.forward: softmax(Q K^T * scale) with
    dropout(0.5) (inverted-dropout scaling), then matmul with V.

    `dropout_p` is accepted for signature parity with the torch module but,
    exactly like the module (which hard-codes nn.Dropout(0.5)), p=0.5 is used.
    """
    B, Lq, D = query.shape
    Bk, Lk, Dk = key.shape
    Bv, Lkv, Dv = value.shape
    assert D == Dk and B == Bk == Bv and Lk == Lkv

    bq = _pick_block(Lq, block_q)
    bk = _pick_block(Lk, block_k)

    out_dtype = jnp.promote_types(query.dtype, value.dtype)
    seed_arr = jnp.asarray([seed], dtype=jnp.int32)
    scale_arr = jnp.asarray([scale_factor], dtype=jnp.float32)

    kernel = functools.partial(_flash_sdpa_dropout_kernel, lq=Lq, lk=Lk)

    return pl.pallas_call(
        kernel,
        out_shape=jax.ShapeDtypeStruct((B, Lq, Dv), out_dtype),
        grid=(B, Lq // bq, Lk // bk),
        in_specs=[
            pl.BlockSpec(memory_space=pltpu.MemorySpace.SMEM),          # seed
            pl.BlockSpec(memory_space=pltpu.MemorySpace.SMEM),          # scale
            pl.BlockSpec((None, bq, D), lambda b, qi, ki: (b, qi, 0)),  # Q
            pl.BlockSpec((None, bk, D), lambda b, qi, ki: (b, ki, 0)),  # K
            pl.BlockSpec((None, bk, Dv), lambda b, qi, ki: (b, ki, 0)),  # V
        ],
        out_specs=pl.BlockSpec((None, bq, Dv), lambda b, qi, ki: (b, qi, 0)),
        scratch_shapes=[
            pltpu.VMEM((bq, 1), jnp.float32),    # running max
            pltpu.VMEM((bq, 1), jnp.float32),    # running denom
            pltpu.VMEM((bq, Dv), jnp.float32),   # output accumulator
        ],
        compiler_params=pltpu.CompilerParams(
            dimension_semantics=("parallel", "parallel", "arbitrary"),
        ),
    )(seed_arr, scale_arr, query, key, value)


if __name__ == "__main__":
    # The original torch snippet's tensors (query D=16 vs key D=128) are not
    # shape-consistent for Q @ K^T; we keep the module's intent with small,
    # consistent shapes: Q (B, Lq, D), K (B, Lk, D), V (B, Lk, Dv).
    B, Lq, Lk, D, Dv = 2, 8, 8, 16, 128
    scale_factor = 1.0
    dropout_p = 0.5   # forwarded for parity; the module hard-codes Dropout(0.5)
    seed = 0

    root = jax.random.PRNGKey(0)
    kq, kk, kv = jax.random.split(root, 3)
    query = jax.random.normal(kq, (B, Lq, D), dtype=jnp.float32)
    key_t = jax.random.normal(kk, (B, Lk, D), dtype=jnp.float32)
    value = jax.random.normal(kv, (B, Lk, Dv), dtype=jnp.float32)

    out = model_forward(query, key_t, value, scale_factor, dropout_p, seed=seed)
    out = jax.block_until_ready(out)

    assert out.shape == (B, Lq, Dv), out.shape
    assert bool(jnp.all(jnp.isfinite(out)))

    # Exact reference: same deterministic hash-based keep mask, plain JAX math.
    s = jnp.einsum("bqd,bkd->bqk", query, key_t).astype(jnp.float32) * scale_factor
    probs = jax.nn.softmax(s, axis=-1)
    b_idx = jnp.arange(B, dtype=jnp.int32)[:, None, None]
    q_idx = jnp.arange(Lq, dtype=jnp.int32)[None, :, None]
    k_idx = jnp.arange(Lk, dtype=jnp.int32)[None, None, :]
    gid = ((b_idx * Lq + q_idx) * Lk + k_idx).astype(jnp.uint32)
    keep = (_hash_u32(gid, jnp.uint32(seed)) & jnp.uint32(1)) == jnp.uint32(0)
    ref = jnp.einsum("bqk,bkd->bqd", jnp.where(keep, probs * 2.0, 0.0), value)

    max_err = float(jnp.max(jnp.abs(out - ref)))
    assert jnp.allclose(out, ref, atol=1e-4, rtol=1e-4), max_err

    print("KERNEL_OK")
</pallas_src>

<mosaic_0001>
module attributes {stable_mosaic.version = 11 : i64} {
  func.func @_flash_sdpa_dropout_kernel(%arg0: i32, %arg1: i32, %arg2: i32, %arg3: memref<1xi32, #tpu.memory_space<smem>>, %arg4: memref<1xf32, #tpu.memory_space<smem>>, %arg5: memref<1x8x16xf32, #tpu.memory_space<vmem>>, %arg6: memref<1x8x16xf32, #tpu.memory_space<vmem>>, %arg7: memref<1x8x128xf32, #tpu.memory_space<vmem>>, %arg8: memref<1x8x128xf32, #tpu.memory_space<vmem>>, %arg9: memref<8x1xf32, #tpu.memory_space<vmem>>, %arg10: memref<8x1xf32, #tpu.memory_space<vmem>>, %arg11: memref<8x128xf32, #tpu.memory_space<vmem>>) attributes {dimension_semantics = [#tpu.dimension_semantics<parallel>, #tpu.dimension_semantics<parallel>, #tpu.dimension_semantics<arbitrary>], iteration_bounds = array<i64: 2, 1, 1>, scalar_prefetch = 0 : i64, scratch_operands = 3 : i64, tpu.core_type = #tpu.core_type<tc>, window_params = [{transform_indices = @transform_0, window_bounds = array<i64: 1>}, {transform_indices = @transform_1, window_bounds = array<i64: 1>}, {transform_indices = @transform_2, window_bounds = array<i64: 1, 8, 16>}, {transform_indices = @transform_3, window_bounds = array<i64: 1, 8, 16>}, {transform_indices = @transform_4, window_bounds = array<i64: 1, 8, 128>}, {transform_indices = @transform_5, window_bounds = array<i64: 1, 8, 128>}]} {
    %c0_i32 = arith.constant 0 : i32
    %0 = arith.cmpi eq, %arg2, %c0_i32 : i32
    %1 = arith.extui %0 : i1 to i32
    %c0_i32_0 = arith.constant 0 : i32
    %2 = arith.cmpi ne, %1, %c0_i32_0 : i32
    scf.if %2 {
      %cst_34 = arith.constant 0xFF800000 : f32
      %76 = vector.broadcast %cst_34 : f32 to vector<8x1xf32>
      %c0_35 = arith.constant 0 : index
      %c0_36 = arith.constant 0 : index
      %77 = vector.load %arg9[%c0_35, %c0_36] : memref<8x1xf32, #tpu.memory_space<vmem>>, vector<8x1xf32>
      tpu.vector_store %arg9[%c0_35, %c0_36], %76 {strides = array<i32>} : memref<8x1xf32, #tpu.memory_space<vmem>>, vector<8x1xf32>,
      %cst_37 = arith.constant 0.000000e+00 : f32
      %78 = vector.broadcast %cst_37 : f32 to vector<8x1xf32>
      %c0_38 = arith.constant 0 : index
      %c0_39 = arith.constant 0 : index
      %79 = vector.load %arg10[%c0_38, %c0_39] : memref<8x1xf32, #tpu.memory_space<vmem>>, vector<8x1xf32>
      tpu.vector_store %arg10[%c0_38, %c0_39], %78 {strides = array<i32>} : memref<8x1xf32, #tpu.memory_space<vmem>>, vector<8x1xf32>,
      %cst_40 = arith.constant 0.000000e+00 : f32
      %80 = vector.broadcast %cst_40 : f32 to vector<8x128xf32>
      %c0_41 = arith.constant 0 : index
      %c0_42 = arith.constant 0 : index
      %81 = vector.load %arg11[%c0_41, %c0_42] : memref<8x128xf32, #tpu.memory_space<vmem>>, vector<8x128xf32>
      tpu.vector_store %arg11[%c0_41, %c0_42], %80 {strides = array<i32>} : memref<8x128xf32, #tpu.memory_space<vmem>>, vector<8x128xf32>,
    } else {
    }
    %c0 = arith.constant 0 : index
    %c0_1 = arith.constant 0 : index
    %c0_2 = arith.constant 0 : index
    %3 = vector.load %arg5[%c0, %c0_1, %c0_2] : memref<1x8x16xf32, #tpu.memory_space<vmem>>, vector<1x8x16xf32>
    %4 = vector.shape_cast %3 : vector<1x8x16xf32> to vector<8x16xf32>
    %c0_3 = arith.constant 0 : index
    %5 = memref.load %arg4[%c0_3] : memref<1xf32, #tpu.memory_space<smem>>
    %6 = vector.broadcast %5 : f32 to vector<8x16xf32>
    %7 = arith.mulf %4, %6 : vector<8x16xf32>
    %c0_4 = arith.constant 0 : index
    %c0_5 = arith.constant 0 : index
    %c0_6 = arith.constant 0 : index
    %8 = vector.load %arg6[%c0_4, %c0_5, %c0_6] : memref<1x8x16xf32, #tpu.memory_space<vmem>>, vector<1x8x16xf32>
    %9 = vector.shape_cast %8 : vector<1x8x16xf32> to vector<8x16xf32>
    %cst = arith.constant dense<0.000000e+00> : vector<8x8xf32>
    %10 = tpu.matmul %7, %9, %cst {dimension_numbers = #tpu.dot_dimension_numbers<[1], [1], [0], [0], [0, 0, 1, 0], [], []>} : vector<8x16xf32>, vector<8x16xf32>, vector<8x8xf32> -> vector<8x8xf32>
    %c0_7 = arith.constant 0 : index
    %c0_8 = arith.constant 0 : index
    %11 = vector.load %arg9[%c0_7, %c0_8] : memref<8x1xf32, #tpu.memory_space<vmem>>, vector<8x1xf32>
    %cst_9 = arith.constant dense<0xFF800000> : vector<8xf32>
    %12 = vector.multi_reduction <maximumf>, %10, %cst_9 [1] : vector<8x8xf32> to vector<8xf32>
    %13 = vector.shape_cast %12 : vector<8xf32> to vector<8x1xf32>
    %14 = arith.maximumf %11, %13 : vector<8x1xf32>
    %15 = arith.subf %11, %14 : vector<8x1xf32>
    %16 = math.exp %15 : vector<8x1xf32>
    %17 = vector.broadcast %14 : vector<8x1xf32> to vector<8x8xf32>
    %18 = arith.subf %10, %17 : vector<8x8xf32>
    %19 = math.exp %18 : vector<8x8xf32>
    %c0_10 = arith.constant 0 : index
    %c0_11 = arith.constant 0 : index
    %20 = vector.load %arg10[%c0_10, %c0_11] : memref<8x1xf32, #tpu.memory_space<vmem>>, vector<8x1xf32>
    %21 = arith.mulf %16, %20 : vector<8x1xf32>
    %cst_12 = arith.constant dense<0.000000e+00> : vector<8xf32>
    %22 = vector.multi_reduction <add>, %19, %cst_12 [1] : vector<8x8xf32> to vector<8xf32>
    %23 = vector.shape_cast %22 : vector<8xf32> to vector<8x1xf32>
    %24 = arith.addf %21, %23 : vector<8x1xf32>
    %c0_13 = arith.constant 0 : index
    %c0_14 = arith.constant 0 : index
    %25 = vector.load %arg10[%c0_13, %c0_14] : memref<8x1xf32, #tpu.memory_space<vmem>>, vector<8x1xf32>
    tpu.vector_store %arg10[%c0_13, %c0_14], %24 {strides = array<i32>} : memref<8x1xf32, #tpu.memory_space<vmem>>, vector<8x1xf32>,
    %26 = tpu.iota {dimensions = array<i32: 0>} : vector<8x8xi32>
    %c8_i32 = arith.constant 8 : i32
    %27 = arith.muli %arg1, %c8_i32 : i32
    %28 = vector.broadcast %27 : i32 to vector<8x8xi32>
    %29 = arith.addi %26, %28 : vector<8x8xi32>
    %30 = tpu.iota {dimensions = array<i32: 1>} : vector<8x8xi32>
    %c8_i32_15 = arith.constant 8 : i32
    %31 = arith.muli %arg2, %c8_i32_15 : i32
    %32 = vector.broadcast %31 : i32 to vector<8x8xi32>
    %33 = arith.addi %30, %32 : vector<8x8xi32>
    %c8_i32_16 = arith.constant 8 : i32
    %34 = arith.muli %arg0, %c8_i32_16 : i32
    %35 = vector.broadcast %34 : i32 to vector<8x8xi32>
    %36 = arith.addi %35, %29 : vector<8x8xi32>
    %c8_i32_17 = arith.constant 8 : i32
    %37 = vector.broadcast %c8_i32_17 : i32 to vector<8x8xi32>
    %38 = arith.muli %36, %37 : vector<8x8xi32>
    %39 = arith.addi %38, %33 : vector<8x8xi32>
    %c0_18 = arith.constant 0 : index
    %40 = memref.load %arg3[%c0_18] : memref<1xi32, #tpu.memory_space<smem>>
    %c-1640531535_i32 = arith.constant -1640531535 : i32
    %41 = vector.broadcast %c-1640531535_i32 : i32 to vector<8x8xi32>
    %42 = arith.muli %39, %41 : vector<8x8xi32>
    %43 = vector.broadcast %40 : i32 to vector<8x8xi32>
    %44 = arith.addi %42, %43 : vector<8x8xi32>
    %c16_i32 = arith.constant 16 : i32
    %45 = vector.broadcast %c16_i32 : i32 to vector<8x8xi32>
    %46 = arith.shrui %44, %45 : vector<8x8xi32>
    %47 = arith.xori %44, %46 : vector<8x8xi32>
    %c2146121005_i32 = arith.constant 2146121005 : i32
    %48 = vector.broadcast %c2146121005_i32 : i32 to vector<8x8xi32>
    %49 = arith.muli %47, %48 : vector<8x8xi32>
    %c15_i32 = arith.constant 15 : i32
    %50 = vector.broadcast %c15_i32 : i32 to vector<8x8xi32>
    %51 = arith.shrui %49, %50 : vector<8x8xi32>
    %52 = arith.xori %49, %51 : vector<8x8xi32>
    %c-2073254261_i32 = arith.constant -2073254261 : i32
    %53 = vector.broadcast %c-2073254261_i32 : i32 to vector<8x8xi32>
    %54 = arith.muli %52, %53 : vector<8x8xi32>
    %c16_i32_19 = arith.constant 16 : i32
    %55 = vector.broadcast %c16_i32_19 : i32 to vector<8x8xi32>
    %56 = arith.shrui %54, %55 : vector<8x8xi32>
    %57 = arith.xori %54, %56 : vector<8x8xi32>
    %c1_i32 = arith.constant 1 : i32
    %58 = vector.broadcast %c1_i32 : i32 to vector<8x8xi32>
    %59 = arith.andi %57, %58 : vector<8x8xi32>
    %c0_i32_20 = arith.constant 0 : i32
    %60 = vector.broadcast %c0_i32_20 : i32 to vector<8x8xi32>
    %61 = arith.cmpi eq, %59, %60 : vector<8x8xi32>
    %cst_21 = arith.constant 0.000000e+00 : f32
    %62 = vector.broadcast %cst_21 : f32 to vector<8x8xf32>
    %63 = arith.select %61, %19, %62 : vector<8x8xi1>, vector<8x8xf32>
    %c0_22 = arith.constant 0 : index
    %c0_23 = arith.constant 0 : index
    %c0_24 = arith.constant 0 : index
    %64 = vector.load %arg7[%c0_22, %c0_23, %c0_24] : memref<1x8x128xf32, #tpu.memory_space<vmem>>, vector<1x8x128xf32>
    %65 = vector.shape_cast %64 : vector<1x8x128xf32> to vector<8x128xf32>
    %cst_25 = arith.constant dense<0.000000e+00> : vector<8x128xf32>
    %66 = tpu.matmul %63, %65, %cst_25 {dimension_numbers = #tpu.dot_dimension_numbers<[1], [0], [0], [1], [0, 0, 1, 1], [], []>} : vector<8x8xf32>, vector<8x128xf32>, vector<8x128xf32> -> vector<8x128xf32>
    %c0_26 = arith.constant 0 : index
    %c0_27 = arith.constant 0 : index
    %67 = vector.load %arg11[%c0_26, %c0_27] : memref<8x128xf32, #tpu.memory_space<vmem>>, vector<8x128xf32>
    %68 = vector.broadcast %16 : vector<8x1xf32> to vector<8x128xf32>
    %69 = arith.mulf %68, %67 : vector<8x128xf32>
    %70 = arith.addf %69, %66 : vector<8x128xf32>
    %c0_28 = arith.constant 0 : index
    %c0_29 = arith.constant 0 : index
    %71 = vector.load %arg11[%c0_28, %c0_29] : memref<8x128xf32, #tpu.memory_space<vmem>>, vector<8x128xf32>
    tpu.vector_store %arg11[%c0_28, %c0_29], %70 {strides = array<i32>} : memref<8x128xf32, #tpu.memory_space<vmem>>, vector<8x128xf32>,
    %c0_30 = arith.constant 0 : index
    %c0_31 = arith.constant 0 : index
    %72 = vector.load %arg9[%c0_30, %c0_31] : memref<8x1xf32, #tpu.memory_space<vmem>>, vector<8x1xf32>
    tpu.vector_store %arg9[%c0_30, %c0_31], %14 {strides = array<i32>} : memref<8x1xf32, #tpu.memory_space<vmem>>, vector<8x1xf32>,
    %c0_i32_32 = arith.constant 0 : i32
    %73 = arith.cmpi eq, %arg2, %c0_i32_32 : i32
    %74 = arith.extui %73 : i1 to i32
    %c0_i32_33 = arith.constant 0 : i32
    %75 = arith.cmpi ne, %74, %c0_i32_33 : i32
    scf.if %75 {
      %c0_34 = arith.constant 0 : index
      %c0_35 = arith.constant 0 : index
      %76 = vector.load %arg11[%c0_34, %c0_35] : memref<8x128xf32, #tpu.memory_space<vmem>>, vector<8x128xf32>
      %c0_36 = arith.constant 0 : index
      %c0_37 = arith.constant 0 : index
      %77 = vector.load %arg10[%c0_36, %c0_37] : memref<8x1xf32, #tpu.memory_space<vmem>>, vector<8x1xf32>
      %cst_38 = arith.constant 2.000000e+00 : f32
      %78 = vector.broadcast %cst_38 : f32 to vector<8x1xf32>
      %79 = arith.divf %78, %77 : vector<8x1xf32>
      %80 = vector.broadcast %79 : vector<8x1xf32> to vector<8x128xf32>
      %81 = arith.mulf %76, %80 : vector<8x128xf32>
      %c0_39 = arith.constant 0 : index
      %c0_40 = arith.constant 0 : index
      %c0_41 = arith.constant 0 : index
      %82 = vector.load %arg8[%c0_39, %c0_40, %c0_41] : memref<1x8x128xf32, #tpu.memory_space<vmem>>, vector<1x8x128xf32>
      %83 = vector.shape_cast %82 : vector<1x8x128xf32> to vector<8x128xf32>
      %84 = vector.shape_cast %81 : vector<8x128xf32> to vector<1x8x128xf32>
      tpu.vector_store %arg8[%c0_39, %c0_40, %c0_41], %84 {strides = array<i32>} : memref<1x8x128xf32, #tpu.memory_space<vmem>>, vector<1x8x128xf32>,
    } else {
    }
    return
  }
  func.func @transform_0(%arg0: i32, %arg1: i32, %arg2: i32) -> i32 {
    %c0_i32 = arith.constant 0 : i32
    %c0_i32_0 = arith.constant 0 : i32
    return %c0_i32 : i32
  }
  func.func @transform_1(%arg0: i32, %arg1: i32, %arg2: i32) -> i32 {
    %c0_i32 = arith.constant 0 : i32
    %c0_i32_0 = arith.constant 0 : i32
    return %c0_i32 : i32
  }
  func.func @transform_2(%arg0: i32, %arg1: i32, %arg2: i32) -> (i32, i32, i32) {
    %c0_i32 = arith.constant 0 : i32
    %c0_i32_0 = arith.constant 0 : i32
    return %arg0, %arg1, %c0_i32 : i32, i32, i32
  }
  func.func @transform_3(%arg0: i32, %arg1: i32, %arg2: i32) -> (i32, i32, i32) {
    %c0_i32 = arith.constant 0 : i32
    %c0_i32_0 = arith.constant 0 : i32
    return %arg0, %arg2, %c0_i32 : i32, i32, i32
  }
  func.func @transform_4(%arg0: i32, %arg1: i32, %arg2: i32) -> (i32, i32, i32) {
    %c0_i32 = arith.constant 0 : i32
    %c0_i32_0 = arith.constant 0 : i32
    return %arg0, %arg2, %c0_i32 : i32, i32, i32
  }
  func.func @transform_5(%arg0: i32, %arg1: i32, %arg2: i32) -> (i32, i32, i32) {
    %c0_i32 = arith.constant 0 : i32
    %c0_i32_0 = arith.constant 0 : i32
    return %arg0, %arg1, %c0_i32 : i32, i32, i32
  }
}

</mosaic_0001>

<llo_original>
// kernel: tpu_custom_call.1
$region0: #{tpu_custom_call.1}
  #allocation0 [shape = 'u32[]', space=smem, size = 0x4, offset = 0x4, fixed_abs, tag = 'smem constant byte address 0x4 - core index']
  #allocation1 [shape = 'u32[144,128]{1,0:T(1,128)}', space=vmem, size = 0x12000, scoped, tag = 'internal scratch']
  #allocation2 [shape = 'f32[8,1]{1,0:T(8,128)}', space=vmem, size = 0x1000, scoped, tag = 'scratch operand']
  #allocation3 [shape = 'f32[8,1]{1,0:T(8,128)}', space=vmem, size = 0x1000, scoped, tag = 'scratch operand']
  #allocation4 [shape = 'f32[8,128]{1,0:T(8,128)}', space=vmem, size = 0x1000, scoped, tag = 'scratch operand']
  #allocation5 [shape = 's32[1]{0:T(128)S(6)}', space=smem, size = 0x200, scoped, tag = 'scoped memory for tpu_custom_call.1']
  #allocation6 [shape = 'f32[1]{0:T(128)S(6)}', space=smem, size = 0x200, scoped, tag = 'scoped memory for tpu_custom_call.1']
  %s0 = inlined_call_operand.<no memory space> [shape: s32[1], index: 0, kind: input, shape index: {}]
  %s1 = inlined_call_operand.<no memory space> [shape: f32[1], index: 1, kind: input, shape index: {}]
  %s2 = inlined_call_operand.hbm [shape: f32[2,8,16], index: 2, kind: input, shape index: {}]
  %s3 = inlined_call_operand.hbm [shape: f32[2,8,16], index: 3, kind: input, shape index: {}]
  %s4 = inlined_call_operand.hbm [shape: f32[2,8,128], index: 4, kind: input, shape index: {}]
  %s5 = inlined_call_operand.hbm [shape: f32[2,8,128], index: 5, kind: output, shape index: {}]
  %s6 = sld [smem:[#allocation0]]
  $region73: #{tpu_custom_call.1} parent=0
    _
  %s8 = ssub.s32 1, %s6
  %s9 = scalar_select 0, %s8, %s6
  %10 = sst [smem:[#allocation5]] %s0
  %11 = sst [smem:[#allocation6]] %s1
  $region1: #{tpu_custom_call.1} parent=0
    #allocation7 [shape = 'u8[8192]{0}', space=vmem, size = 0x2000, scoped, tag = 'input window, operand 2']
    #allocation8 [shape = 's32[2]{0}', space=sflag, size = 0x8, scoped, tag = 'scoped memory for tpu_custom_call.1']
    #allocation9 [shape = 's32[2]{0}', space=sflag, size = 0x8, scoped, tag = 'scoped memory for tpu_custom_call.1']
    #allocation10 [shape = 'u8[8192]{0}', space=vmem, size = 0x2000, scoped, tag = 'input window, operand 3']
    #allocation11 [shape = 's32[2]{0}', space=sflag, size = 0x8, scoped, tag = 'scoped memory for tpu_custom_call.1']
    #allocation12 [shape = 'u8[8192]{0}', space=vmem, size = 0x2000, scoped, tag = 'input window, operand 4']
    #allocation13 [shape = 'u8[8192]{0}', space=vmem, size = 0x2000, scoped, tag = 'output window, operand 0']
    %12 = vsyncpa [#allocation8], 0
    %s13 = scalar_lea.sflag [#allocation8], 1
    %14 = vsyncpa %s13, 0
    %15 = vsyncpa [#allocation11], 0
    %s16 = scalar_lea.sflag [#allocation11], 1
    %17 = vsyncpa %s16, 0
    %18 = vsyncpa [#allocation9], 0
    %s19 = scalar_lea.sflag [#allocation9], 1
    %20 = vsyncpa %s19, 0
    loop: start=0, step=1, limit=4
    $region2: #{tpu_custom_call.1} parent=1 // loop_pre_header
      _
    $region3: #{tpu_custom_call.1} parent=1 // loop_header
      %s22 = sphi 0, %s26
      %p23 = scmp.ge.s32.totalorder %s22, 4
      %s29 = sphi 0, %s48
      %s30 = sphi 0, %s44
      %s31 = sphi 0, %s40
      %s32 = sphi 0, %s29
      %s33 = sphi 0, %s30
      %s34 = sphi 0, %s31
      %s35 = sphi 0, %s32
      %s36 = sphi 0, %s33
      %s37 = sphi 0, %s34
      %s49 = sphi 0, %s49
      %s51 = sphi 0, %s49
      %s52 = sphi 0, %s51
      %s66 = sphi 0, %s52
      %s70 = sphi 0, %s70
      %s72 = sphi 0, %s70
      %s73 = sphi 0, %s72
      %s87 = sphi 0, %s73
      %s95 = sphi 0, %s97
      %s98 = sphi 0, %s95
      %s99 = sphi 0, %s98
      %s115 = sphi 0, %s99
      %s123 = sphi 0, %s125
      %s126 = sphi 0, %s123
      %s127 = sphi 0, %s126
      %s143 = sphi 0, %s127
      %s151 = sphi 0, %s153
      %s154 = sphi 0, %s151
      %s155 = sphi 0, %s154
      %s171 = sphi 0, %s155
      %s179 = sphi 0, %s181
      %s182 = sphi 0, %s179
      %s183 = sphi 0, %s182
      %s199 = sphi 0, %s183
    $region4: #{tpu_custom_call.1} parent=1 // loop_header_branch
      %25 = sbr.rel (%p23) target = $region8
    $region5: #{tpu_custom_call.1} parent=1 // loop_body
      %s27 = ssub.s32 %s22, 1
      %s28 = ssub.s32 %s22, 2
      %s38 = sadd.s32 1, %s31
      %p39 = scmp.ge.s32.totalorder %s38, 1
      %s40 = scalar_select %p39, 0, %s38
      %s41 = sadd.s32 1, %s30
      %s42 = scalar_select %p39, %s41, %s30
      %p43 = scmp.ge.s32.totalorder %s42, 1
      %s44 = scalar_select %p43, 0, %s42
      %s45 = sadd.s32 1, %s29
      %s46 = scalar_select %p43, %s45, %s29
      %p47 = scmp.ge.s32.totalorder %s46, 2
      %s48 = scalar_select %p47, 0, %s46
      %s50 = sadd.s32 %s49, 1
      %p53 = scmp.eq.s32.totalorder %s22, 1
      %p54 = scmp.ne.s32.totalorder %s49, %s51
      %p55 = scmp.eq.s32.totalorder %s22, 0
      %p56 = por %p54, %p55
      %p57 = scmp.ne.s32.totalorder %s49, %s51
      %p58 = scmp.eq.s32.totalorder %s27, 1
      %p59 = por %p57, %p58
      %p60 = scmp.ne.s32.totalorder %s51, %s52
      %p61 = scmp.eq.s32.totalorder %s27, 0
      %p62 = por %p60, %p61
      %p63 = scmp.ne.s32.totalorder %s51, %s52
      %p64 = scmp.eq.s32.totalorder %s28, 1
      %p65 = por %p63, %p64
      %p67 = scmp.ne.s32.totalorder %s52, %s66
      %p68 = scmp.eq.s32.totalorder %s28, 0
      %p69 = por %p67, %p68
      %s71 = sadd.s32 %s70, 1
      %p74 = scmp.eq.s32.totalorder %s22, 1
      %p75 = scmp.ne.s32.totalorder %s70, %s72
      %p76 = scmp.eq.s32.totalorder %s22, 0
      %p77 = por %p75, %p76
      %p78 = scmp.ne.s32.totalorder %s70, %s72
      %p79 = scmp.eq.s32.totalorder %s27, 1
      %p80 = por %p78, %p79
      %p81 = scmp.ne.s32.totalorder %s72, %s73
      %p82 = scmp.eq.s32.totalorder %s27, 0
      %p83 = por %p81, %p82
      %p84 = scmp.ne.s32.totalorder %s72, %s73
      %p85 = scmp.eq.s32.totalorder %s28, 1
      %p86 = por %p84, %p85
      %p88 = scmp.ne.s32.totalorder %s73, %s87
      %p89 = scmp.eq.s32.totalorder %s28, 0
      %p90 = por %p88, %p89
      %s91 = ssub.s32 %s29, %s48
      %s92 = ssub.s32 %s30, %s44
      %s93 = sor.u32 %s91, %s92
      %p94 = scmp.eq.s32.totalorder %s93, 0
      %s96 = sadd.s32 %s95, 1
      %s97 = scalar_select %p94, %s95, %s96
      %p100 = pneg %p94
      %p101 = scmp.eq.s32.totalorder %s22, 1
      %p102 = por %p100, %p101
      %p103 = scmp.ne.s32.totalorder %s95, %s98
      %p104 = scmp.eq.s32.totalorder %s22, 0
      %p105 = por %p103, %p104
      %p106 = scmp.ne.s32.totalorder %s95, %s98
      %p107 = scmp.eq.s32.totalorder %s27, 1
      %p108 = por %p106, %p107
      %p109 = scmp.ne.s32.totalorder %s98, %s99
      %p110 = scmp.eq.s32.totalorder %s27, 0
      %p111 = por %p109, %p110
      %p112 = scmp.ne.s32.totalorder %s98, %s99
      %p113 = scmp.eq.s32.totalorder %s28, 1
      %p114 = por %p112, %p113
      %p116 = scmp.ne.s32.totalorder %s99, %s115
      %p117 = scmp.eq.s32.totalorder %s28, 0
      %p118 = por %p116, %p117
      %s119 = ssub.s32 %s29, %s48
      %s120 = ssub.s32 %s31, %s40
      %s121 = sor.u32 %s119, %s120
      %p122 = scmp.eq.s32.totalorder %s121, 0
      %s124 = sadd.s32 %s123, 1
      %s125 = scalar_select %p122, %s123, %s124
      %p128 = pneg %p122
      %p129 = scmp.eq.s32.totalorder %s22, 1
      %p130 = por %p128, %p129
      %p131 = scmp.ne.s32.totalorder %s123, %s126
      %p132 = scmp.eq.s32.totalorder %s22, 0
      %p133 = por %p131, %p132
      %p134 = scmp.ne.s32.totalorder %s123, %s126
      %p135 = scmp.eq.s32.totalorder %s27, 1
      %p136 = por %p134, %p135
      %p137 = scmp.ne.s32.totalorder %s126, %s127
      %p138 = scmp.eq.s32.totalorder %s27, 0
      %p139 = por %p137, %p138
      %p140 = scmp.ne.s32.totalorder %s126, %s127
      %p141 = scmp.eq.s32.totalorder %s28, 1
      %p142 = por %p140, %p141
      %p144 = scmp.ne.s32.totalorder %s127, %s143
      %p145 = scmp.eq.s32.totalorder %s28, 0
      %p146 = por %p144, %p145
      %s147 = ssub.s32 %s29, %s48
      %s148 = ssub.s32 %s31, %s40
      %s149 = sor.u32 %s147, %s148
      %p150 = scmp.eq.s32.totalorder %s149, 0
      %s152 = sadd.s32 %s151, 1
      %s153 = scalar_select %p150, %s151, %s152
      %p156 = pneg %p150
      %p157 = scmp.eq.s32.totalorder %s22, 1
      %p158 = por %p156, %p157
      %p159 = scmp.ne.s32.totalorder %s151, %s154
      %p160 = scmp.eq.s32.totalorder %s22, 0
      %p161 = por %p159, %p160
      %p162 = scmp.ne.s32.totalorder %s151, %s154
      %p163 = scmp.eq.s32.totalorder %s27, 1
      %p164 = por %p162, %p163
      %p165 = scmp.ne.s32.totalorder %s154, %s155
      %p166 = scmp.eq.s32.totalorder %s27, 0
      %p167 = por %p165, %p166
      %p168 = scmp.ne.s32.totalorder %s154, %s155
      %p169 = scmp.eq.s32.totalorder %s28, 1
      %p170 = por %p168, %p169
      %p172 = scmp.ne.s32.totalorder %s155, %s171
      %p173 = scmp.eq.s32.totalorder %s28, 0
      %p174 = por %p172, %p173
      %s175 = ssub.s32 %s29, %s48
      %s176 = ssub.s32 %s30, %s44
      %s177 = sor.u32 %s175, %s176
      %p178 = scmp.eq.s32.totalorder %s177, 0
      %s180 = sadd.s32 %s179, 1
      %s181 = scalar_select %p178, %s179, %s180
      %p184 = pneg %p178
      %p185 = scmp.eq.s32.totalorder %s22, 1
      %p186 = por %p184, %p185
      %p187 = scmp.ne.s32.totalorder %s179, %s182
      %p188 = scmp.eq.s32.totalorder %s22, 0
      %p189 = por %p187, %p188
      %p190 = scmp.ne.s32.totalorder %s179, %s182
      %p191 = scmp.eq.s32.totalorder %s27, 1
      %p192 = por %p190, %p191
      %p193 = scmp.ne.s32.totalorder %s182, %s183
      %p194 = scmp.eq.s32.totalorder %s27, 0
      %p195 = por %p193, %p194
      %p196 = scmp.ne.s32.totalorder %s182, %s183
      %p197 = scmp.eq.s32.totalorder %s28, 1
      %p198 = por %p196, %p197
      %p200 = scmp.ne.s32.totalorder %s183, %s199
      %p201 = scmp.eq.s32.totalorder %s28, 0
      %p202 = por %p200, %p201
      %p203 = scmp.le.s32.totalorder 1, %s22
      %p204 = scmp.lt.s32.totalorder %s22, 3
      %p205 = pnand %p203, %p204
      %p206 = pneg %p205
      // Predicated region
      $region9: #{tpu_custom_call.1} parent=5 // pred_check
        _
      $region10: #{tpu_custom_call.1} parent=5 // pred_check_branch
        %208 = sbr.rel (%p205) target = $region12
      $region11: #{tpu_custom_call.1} parent=5 // pred_region
        %s209 = ssub.s32 %s22, 1
        // Predicated region
        $region13: #{tpu_custom_call.1} parent=11 // pred_check
          %p210 = pneg %p62
        $region14: #{tpu_custom_call.1} parent=11 // pred_check_branch
          %212 = sbr.rel (%p210) target = $region16
        $region15: #{tpu_custom_call.1} parent=11 // pred_region
          _
        $region16: #{tpu_custom_call.1} parent=11 // pred_fallthru
          _
        // Predicated region
        $region17: #{tpu_custom_call.1} parent=11 // pred_check
          %p213 = pneg %p83
        $region18: #{tpu_custom_call.1} parent=11 // pred_check_branch
          %215 = sbr.rel (%p213) target = $region20
        $region19: #{tpu_custom_call.1} parent=11 // pred_region
          _
        $region20: #{tpu_custom_call.1} parent=11 // pred_fallthru
          _
      $region12: #{tpu_custom_call.1} parent=5 // pred_fallthru
        _
      %p216 = scmp.lt.s32.totalorder %s22, 2
      // Predicated region
      $region21: #{tpu_custom_call.1} parent=5 // pred_check
        %p217 = pneg %p216
      $region22: #{tpu_custom_call.1} parent=5 // pred_check_branch
        %219 = sbr.rel (%p217) target = $region24
      $region23: #{tpu_custom_call.1} parent=5 // pred_region
        // Predicated region
        $region25: #{tpu_custom_call.1} parent=23 // pred_check
          %p220 = pneg %p105
        $region26: #{tpu_custom_call.1} parent=23 // pred_check_branch
          %222 = sbr.rel (%p220) target = $region28
        $region27: #{tpu_custom_call.1} parent=23 // pred_region
          %s223 = sand.u32 %s95, 1
          %s224 = scalar_lea.sflag [#allocation8], %s223
          %s225 = sand.u32 %s95, 1
          %s226 = smul.addr %s225, 8
          %s227 = scalar_lea.vmem [#allocation7], %s226
          %s229 = ssub.s32 128, 128
          %230 = vsyncadd %s224, %s229
          %s231 = sadd.s32 %s30, %s29
          %s232 = smul.addr %s231, 128
          %s233 = scalar_lea.hbm %s2, %s232
          %s235 = sshll.u32 %s227, 4
          %s236 = int_to_ptr.vmem [resolvable:$true] %s235
          %238 = dma.hbm_to_vmem [thread:$0]  %s233, 128, %s236, %s224
        $region28: #{tpu_custom_call.1} parent=23 // pred_fallthru
          _
        // Predicated region
        $region29: #{tpu_custom_call.1} parent=23 // pred_check
          %p239 = pneg %p133
        $region30: #{tpu_custom_call.1} parent=23 // pred_check_branch
          %241 = sbr.rel (%p239) target = $region32
        $region31: #{tpu_custom_call.1} parent=23 // pred_region
          %s242 = sand.u32 %s22, 1
          %s243 = scalar_lea.sflag [#allocation11], %s242
          %s244 = sand.u32 %s123, 1
          %s245 = smul.addr %s244, 8
          %s246 = scalar_lea.vmem [#allocation10], %s245
          %s248 = ssub.s32 128, 128
          %249 = vsyncadd %s243, %s248
          %s250 = sadd.s32 %s31, %s29
          %s251 = smul.addr %s250, 128
          %s252 = scalar_lea.hbm %s3, %s251
          %s254 = sshll.u32 %s246, 4
          %s255 = int_to_ptr.vmem [resolvable:$true] %s254
          %257 = dma.hbm_to_vmem [thread:$0]  %s252, 128, %s255, %s243
        $region32: #{tpu_custom_call.1} parent=23 // pred_fallthru
          _
        // Predicated region
        $region33: #{tpu_custom_call.1} parent=23 // pred_check
          %p258 = pneg %p161
        $region34: #{tpu_custom_call.1} parent=23 // pred_check_branch
          %260 = sbr.rel (%p258) target = $region36
        $region35: #{tpu_custom_call.1} parent=23 // pred_region
          %s261 = sand.u32 %s22, 1
          %s262 = scalar_lea.sflag [#allocation11], %s261
          %s263 = sand.u32 %s151, 1
          %s264 = smul.addr %s263, 8
          %s265 = scalar_lea.vmem [#allocation12], %s264
          %s267 = ssub.s32 128, 128
          %268 = vsyncadd %s262, %s267
          %s269 = sadd.s32 %s31, %s29
          %s270 = smul.addr %s269, 128
          %s271 = scalar_lea.hbm %s4, %s270
          %s273 = sshll.u32 %s265, 4
          %s274 = int_to_ptr.vmem [resolvable:$true] %s273
          %276 = dma.hbm_to_vmem [thread:$0]  %s271, 128, %s274, %s262
        $region36: #{tpu_custom_call.1} parent=23 // pred_fallthru
          _
      $region24: #{tpu_custom_call.1} parent=5 // pred_fallthru
        _
      %p277 = scmp.le.s32.totalorder 1, %s22
      %p278 = scmp.lt.s32.totalorder %s22, 3
      %p279 = pnand %p277, %p278
      %p280 = pneg %p279
      // Predicated region
      $region37: #{tpu_custom_call.1} parent=5 // pred_check
        _
      $region38: #{tpu_custom_call.1} parent=5 // pred_check_branch
        %282 = sbr.rel (%p279) target = $region40
      $region39: #{tpu_custom_call.1} parent=5 // pred_region
        %s283 = ssub.s32 %s22, 1
        %s284 = sand.u32 %s98, 1
        %s285 = scalar_lea.sflag [#allocation8], %s284
        %s286 = sand.u32 %s98, 1
        %s287 = smul.addr %s286, 8
        %s288 = scalar_lea.vmem [#allocation7], %s287
        // Predicated region
        $region41: #{tpu_custom_call.1} parent=39 // pred_check
          %p289 = pneg %p111
        $region42: #{tpu_custom_call.1} parent=39 // pred_check_branch
          %291 = sbr.rel (%p289) target = $region44
        $region43: #{tpu_custom_call.1} parent=39 // pred_region
          %292 = dma.done %s285, 128
        $region44: #{tpu_custom_call.1} parent=39 // pred_fallthru
          _
        %s293 = sand.u32 %s27, 1
        %s294 = scalar_lea.sflag [#allocation11], %s293
        %s295 = sand.u32 %s126, 1
        %s296 = smul.addr %s295, 8
        %s297 = scalar_lea.vmem [#allocation10], %s296
        // Predicated region
        $region45: #{tpu_custom_call.1} parent=39 // pred_check
          %p298 = pneg %p139
        $region46: #{tpu_custom_call.1} parent=39 // pred_check_branch
          %300 = sbr.rel (%p298) target = $region48
        $region47: #{tpu_custom_call.1} parent=39 // pred_region
          %301 = dma.done %s294, 128
        $region48: #{tpu_custom_call.1} parent=39 // pred_fallthru
          _
        %s302 = sand.u32 %s27, 1
        %s303 = scalar_lea.sflag [#allocation11], %s302
        %s304 = sand.u32 %s154, 1
        %s305 = smul.addr %s304, 8
        %s306 = scalar_lea.vmem [#allocation12], %s305
        // Predicated region
        $region49: #{tpu_custom_call.1} parent=39 // pred_check
          %p307 = pneg %p167
        $region50: #{tpu_custom_call.1} parent=39 // pred_check_branch
          %309 = sbr.rel (%p307) target = $region52
        $region51: #{tpu_custom_call.1} parent=39 // pred_region
          %310 = dma.done %s303, 128
        $region52: #{tpu_custom_call.1} parent=39 // pred_fallthru
          _
        %p311 = pneg %p62
        %p312 = pneg %p59
        %p313 = pneg %p83
        %p314 = pneg %p80
        %s315 = sand.u32 %s98, 1
        %s316 = scalar_lea.sflag [#allocation8], %s315
        %s317 = sand.u32 %s98, 1
        %s318 = smul.addr %s317, 8
        %s319 = scalar_lea.vmem [#allocation7], %s318
        %p320 = pneg %p111
        %p321 = pneg %p108
        %s322 = sand.u32 %s27, 1
        %s323 = scalar_lea.sflag [#allocation11], %s322
        %s324 = sand.u32 %s126, 1
        %s325 = smul.addr %s324, 8
        %s326 = scalar_lea.vmem [#allocation10], %s325
        %p327 = pneg %p139
        %p328 = pneg %p136
        %s329 = sand.u32 %s27, 1
        %s330 = scalar_lea.sflag [#allocation11], %s329
        %s331 = sand.u32 %s154, 1
        %s332 = smul.addr %s331, 8
        %s333 = scalar_lea.vmem [#allocation12], %s332
        %p334 = pneg %p167
        %p335 = pneg %p164
        %p336 = pneg %p195
        %p337 = pneg %p192
        %s338 = sand.u32 %s182, 1
        %s339 = scalar_lea.sflag [#allocation9], %s338
        %s340 = sand.u32 %s182, 1
        %s341 = smul.addr %s340, 8
        %s342 = scalar_lea.vmem [#allocation13], %s341
        %p343 = scmp.eq.s32.totalorder %s34, 0
        // Predicated region
        $region53: #{tpu_custom_call.1} parent=39 // pred_check
          %p344 = pneg %p343
        $region54: #{tpu_custom_call.1} parent=39 // pred_check_branch
          %346 = sbr.rel (%p344) target = $region56
        $region55: #{tpu_custom_call.1} parent=39 // pred_region
          %vm347 = vcmask 7168
          %348 = vst.msk [vmem:[#allocation2] sm:$0xff] %vm347, -inf
          %349 = vst.msk [vmem:[#allocation3] sm:$0xff] %vm347, 0.0
          %350 = vst [vmem:[#allocation4] sm:$0xff] 0.0
        $region56: #{tpu_custom_call.1} parent=39 // pred_fallthru
          _
        %v351 = vld [vmem:[%s288] sm:$0xff]
        %s352 = sld [smem:[#allocation6]]
        %v353 = vstv %s352
        %v354 = vmul.f32 %v351, %v353
        %v355 = vld [vmem:[%s297] sm:$0xff]
        %vm356 = vcmask 130048
        %v358 = vsel %vm356, %v354, 0
        %v361 = vsel %vm356, %v355, 0
        %363 = vmatprep.subr.mxu0 0.0
        %364 = vmatpush1.xpose.msra.mxu0 %v361
        %365 = vmatprep.subr.mxu0 0.0
        %366 = vmatpush1.xpose.msra.mxu0 0.0
        %367 = vmatprep.subr.mxu0 0.0
        %368 = vmatpush1.xpose.msra.mxu0 0.0
        %369 = vmatprep.subr.mxu0 0.0
        %370 = vmatpush1.xpose.msra.mxu0 0.0
        %371 = vmatprep.subr.mxu0 0.0
        %372 = vmatpush1.xpose.msra.mxu0 0.0
        %373 = vmatprep.subr.mxu0 0.0
        %374 = vmatpush1.xpose.msra.mxu0 0.0
        %375 = vmatprep.subr.mxu0 0.0
        %376 = vmatpush1.xpose.msra.mxu0 0.0
        %377 = vmatprep.subr.mxu0 0.0
        %378 = vmatpush1.xpose.msra.mxu0 0.0
        %379 = vmatprep.subr.mxu0 0.0
        %380 = vmatpush1.xpose.msra.mxu0 0.0
        %381 = vmatprep.subr.mxu0 0.0
        %382 = vmatpush1.xpose.msra.mxu0 0.0
        %383 = vmatprep.subr.mxu0 0.0
        %384 = vmatpush1.xpose.msra.mxu0 0.0
        %385 = vmatprep.subr.mxu0 0.0
        %386 = vmatpush1.xpose.msra.mxu0 0.0
        %387 = vmatprep.subr.mxu0 0.0
        %388 = vmatpush1.xpose.msra.mxu0 0.0
        %389 = vmatprep.subr.mxu0 0.0
        %390 = vmatpush1.xpose.msra.mxu0 0.0
        %391 = vmatprep.subr.mxu0 0.0
        %392 = vmatpush1.xpose.msra.mxu0 0.0
        %393 = vmatprep.subr.mxu0 0.0
        %394 = vmatpush1.xpose.msra.mxu0 0.0
        %395 = vmatprep.subr.mxu0 0.0
        %396 = vmatpush1.xpose.msra.mxu0 0.0
        %397 = vmatprep.subr.mxu0 0.0
        %398 = vmatpush1.xpose.msra.mxu0 0.0
        %399 = vmatprep.subr.mxu0 0.0
        %400 = vmatpush1.xpose.msra.mxu0 0.0
        %401 = vmatprep.subr.mxu0 0.0
        %402 = vmatpush1.xpose.msra.mxu0 0.0
        %403 = vmatprep.subr.mxu0 0.0
        %404 = vmatpush1.xpose.msra.mxu0 0.0
        %405 = vmatprep.subr.mxu0 0.0
        %406 = vmatpush1.xpose.msra.mxu0 0.0
        %407 = vmatprep.subr.mxu0 0.0
        %408 = vmatpush1.xpose.msra.mxu0 0.0
        %409 = vmatprep.subr.mxu0 0.0
        %410 = vmatpush1.xpose.msra.mxu0 0.0
        %411 = vmatprep.subr.mxu0 0.0
        %412 = vmatpush1.xpose.msra.mxu0 0.0
        %413 = vmatprep.subr.mxu0 0.0
        %414 = vmatpush1.xpose.msra.mxu0 0.0
        %415 = vmatprep.subr.mxu0 0.0
        %416 = vmatpush1.xpose.msra.mxu0 0.0
        %417 = vmatprep.subr.mxu0 0.0
        %418 = vmatpush1.xpose.msra.mxu0 0.0
        %419 = vmatprep.subr.mxu0 0.0
        %420 = vmatpush1.xpose.msra.mxu0 0.0
        %421 = vmatprep.subr.mxu0 0.0
        %422 = vmatpush1.xpose.msra.mxu0 0.0
        %423 = vmatprep.subr.mxu0 0.0
        %424 = vmatpush1.xpose.msra.mxu0 0.0
        %425 = vmatprep.subr.mxu0 0.0
        %426 = vmatpush1.xpose.msra.mxu0 0.0
        %427 = vmatprep.mubr.f32.mxu0 0.0
        %428 = vmatmul.mubr.f32.gmra.mrb[0].mxu0 %v358
        %v429 = vpop.f32.mrb[0].mxu0
        %v430 = vadd.f32 0.0, %v429
        %v431 = vpop.f32.mrb[0].mxu0
        %432 = vdwg.mxu0
        %v433 = vld [vmem:[#allocation2] sm:$0xff]
        %vm434 = vcmask 64512
        %v435 = vsel %vm434, %v430, -inf
        %436 = vmax.xlane.f32.xlu0 %v435
        %v437 = vpop.xlane.xlu0 %436
        %v438 = vmax.f32 %v433, %v437
        %v439 = vsub.f32 %v433, %v438
        %v440 = vmul.f32 %v439, 1.442695
        %v441 = vpow.pop %v440
        %443 = vset.pattern.permute.xlu0 0
        %444 = vperm.xlu0 %443, %v438
        %v445 = vpop.permute.xlu0 %444
        %v447 = vsub.f32 %v430, %v445
        %v448 = vmul.f32 %v447, 1.442695
        %v449 = vpow.pop %v448
        %v450 = vld [vmem:[#allocation3] sm:$0xff]
        %v451 = vmul.f32 %v441, %v450
        %v452 = vsel %vm434, %v449, 0.0
        %453 = vadd.xlane.f32.xlu0 %v452
        %v454 = vpop.xlane.xlu0 %453
        %v455 = vadd.f32 %v451, %v454
        %vm456 = vcmask 7168
        %457 = vst.msk [vmem:[#allocation3] sm:$0xff] %vm456, %v455
        %v458 = vlaneseq
        %v459 = vshrl.u32 %v458, 7
        %s460 = smul.u32 %s33, 8
        %v461 = vstv %s460
        %v462 = vadd.s32 %v459, %v461
        %v463 = vlaneseq
        %v464 = vand.u32 %v463, 127
        %s465 = smul.u32 %s34, 8
        %v466 = vstv %s465
        %v467 = vadd.s32 %v464, %v466
        %s468 = smul.u32 %s32, 8
        %v469 = vstv %s468
        %v470 = vadd.s32 %v469, %v462
        %v471 = vmul.u32 %v470, 8
        %v472 = vadd.s32 %v471, %v467
        %s473 = sld [smem:[#allocation5]]
        %v474 = vmul.u32 %v472, 2654435761
        %v475 = vstv %s473
        %v476 = vadd.s32 %v474, %v475
        %v477 = vshrl.u32 %v476, 16
        %v478 = vxor.u32 %v476, %v477
        %v479 = vmul.u32 %v478, 2146121005
        %v480 = vshrl.u32 %v479, 15
        %v481 = vxor.u32 %v479, %v480
        %v482 = vmul.u32 %v481, 2221713035
        %v483 = vshrl.u32 %v482, 16
        %v484 = vxor.u32 %v482, %v483
        %v485 = vand.u32 %v484, 1
        %vm486 = vcmp.eq.s32.totalorder %v485, 0
        %v487 = vsel %vm486, %v449, 0.0
        %v488 = vld [vmem:[%s306] sm:$0xff]
        %v490 = vsel %vm434, %v487, 0
        %492 = vmatprep.subr.mxu0 0.0
        %493 = vmatpush1.msra.mxu0 %v488
        %494 = vmatprep.subr.mxu0 0.0
        %495 = vmatpush1.msra.mxu0 0.0
        %496 = vmatprep.subr.mxu0 0.0
        %497 = vmatpush1.msra.mxu0 0.0
        %498 = vmatprep.subr.mxu0 0.0
        %499 = vmatpush1.msra.mxu0 0.0
        %500 = vmatprep.subr.mxu0 0.0
        %501 = vmatpush1.msra.mxu0 0.0
        %502 = vmatprep.subr.mxu0 0.0
        %503 = vmatpush1.msra.mxu0 0.0
        %504 = vmatprep.subr.mxu0 0.0
        %505 = vmatpush1.msra.mxu0 0.0
        %506 = vmatprep.subr.mxu0 0.0
        %507 = vmatpush1.msra.mxu0 0.0
        %508 = vmatprep.subr.mxu0 0.0
        %509 = vmatpush1.msra.mxu0 0.0
        %510 = vmatprep.subr.mxu0 0.0
        %511 = vmatpush1.msra.mxu0 0.0
        %512 = vmatprep.subr.mxu0 0.0
        %513 = vmatpush1.msra.mxu0 0.0
        %514 = vmatprep.subr.mxu0 0.0
        %515 = vmatpush1.msra.mxu0 0.0
        %516 = vmatprep.subr.mxu0 0.0
        %517 = vmatpush1.msra.mxu0 0.0
        %518 = vmatprep.subr.mxu0 0.0
        %519 = vmatpush1.msra.mxu0 0.0
        %520 = vmatprep.subr.mxu0 0.0
        %521 = vmatpush1.msra.mxu0 0.0
        %522 = vmatprep.subr.mxu0 0.0
        %523 = vmatpush1.msra.mxu0 0.0
        %524 = vmatprep.subr.mxu0 0.0
        %525 = vmatpush1.msra.mxu0 0.0
        %526 = vmatprep.subr.mxu0 0.0
        %527 = vmatpush1.msra.mxu0 0.0
        %528 = vmatprep.subr.mxu0 0.0
        %529 = vmatpush1.msra.mxu0 0.0
        %530 = vmatprep.subr.mxu0 0.0
        %531 = vmatpush1.msra.mxu0 0.0
        %532 = vmatprep.subr.mxu0 0.0
        %533 = vmatpush1.msra.mxu0 0.0
        %534 = vmatprep.subr.mxu0 0.0
        %535 = vmatpush1.msra.mxu0 0.0
        %536 = vmatprep.subr.mxu0 0.0
        %537 = vmatpush1.msra.mxu0 0.0
        %538 = vmatprep.subr.mxu0 0.0
        %539 = vmatpush1.msra.mxu0 0.0
        %540 = vmatprep.subr.mxu0 0.0
        %541 = vmatpush1.msra.mxu0 0.0
        %542 = vmatprep.subr.mxu0 0.0
        %543 = vmatpush1.msra.mxu0 0.0
        %544 = vmatprep.subr.mxu0 0.0
        %545 = vmatpush1.msra.mxu0 0.0
        %546 = vmatprep.subr.mxu0 0.0
        %547 = vmatpush1.msra.mxu0 0.0
        %548 = vmatprep.subr.mxu0 0.0
        %549 = vmatpush1.msra.mxu0 0.0
        %550 = vmatprep.subr.mxu0 0.0
        %551 = vmatpush1.msra.mxu0 0.0
        %552 = vmatprep.subr.mxu0 0.0
        %553 = vmatpush1.msra.mxu0 0.0
        %554 = vmatprep.subr.mxu0 0.0
        %555 = vmatpush1.msra.mxu0 0.0
        %556 = vmatprep.mubr.f32.mxu0 0.0
        %557 = vmatmul.mubr.f32.gmra.mrb[0].mxu0 %v490
        %v558 = vpop.f32.mrb[0].mxu0
        %v559 = vadd.f32 0.0, %v558
        %v560 = vpop.f32.mrb[0].mxu0
        %561 = vdwg.mxu0
        %v562 = vld [vmem:[#allocation4] sm:$0xff]
        %564 = vset.pattern.permute.xlu0 0
        %565 = vperm.xlu0 %564, %v441
        %v566 = vpop.permute.xlu0 %565
        %v568 = vmul.f32 %v566, %v562
        %v569 = vadd.f32 %v568, %v559
        %570 = vst [vmem:[#allocation4] sm:$0xff] %v569
        %571 = vst.msk [vmem:[#allocation2] sm:$0xff] %vm456, %v438
        // Predicated region
        $region57: #{tpu_custom_call.1} parent=39 // pred_check
          %p572 = pneg %p343
        $region58: #{tpu_custom_call.1} parent=39 // pred_check_branch
          %574 = sbr.rel (%p572) target = $region60
        $region59: #{tpu_custom_call.1} parent=39 // pred_region
          %v575 = vld [vmem:[#allocation4] sm:$0xff]
          %v576 = vld [vmem:[#allocation3] sm:$0xff]
          %v577 = vrcp.pop %v576
          %v578 = vmul.f32 2.0, %v577
          %580 = vset.pattern.permute.xlu0 0
          %581 = vperm.xlu0 %580, %v578
          %v582 = vpop.permute.xlu0 %581
          %v584 = vmul.f32 %v575, %v582
          %585 = vst [vmem:[%s342] sm:$0xff] %v584
        $region60: #{tpu_custom_call.1} parent=39 // pred_fallthru
          _
        %s586 = sand.u32 %s182, 1
        %s587 = scalar_lea.sflag [#allocation9], %s586
        %s588 = sand.u32 %s182, 1
        %s589 = smul.addr %s588, 8
        %s590 = scalar_lea.vmem [#allocation13], %s589
        // Predicated region
        $region61: #{tpu_custom_call.1} parent=39 // pred_check
          %p591 = pneg %p192
        $region62: #{tpu_custom_call.1} parent=39 // pred_check_branch
          %593 = sbr.rel (%p591) target = $region64
        $region63: #{tpu_custom_call.1} parent=39 // pred_region
          %s595 = ssub.s32 128, 128
          %596 = vsyncadd %s587, %s595
          %s597 = sadd.s32 %s33, %s32
          %s598 = smul.addr %s597, 128
          %s599 = scalar_lea.hbm %s5, %s598
          %s601 = sshll.u32 %s590, 4
          %s602 = int_to_ptr.vmem [resolvable:$true] %s601
          %604 = dma.vmem_to_hbm [thread:$0]  %s602, 128, %s599, %s587
        $region64: #{tpu_custom_call.1} parent=39 // pred_fallthru
          _
      $region40: #{tpu_custom_call.1} parent=5 // pred_fallthru
        _
      %p605 = scmp.le.s32.totalorder 2, %s22
      // Predicated region
      $region65: #{tpu_custom_call.1} parent=5 // pred_check
        %p606 = pneg %p605
      $region66: #{tpu_custom_call.1} parent=5 // pred_check_branch
        %608 = sbr.rel (%p606) target = $region68
      $region67: #{tpu_custom_call.1} parent=5 // pred_region
        %s609 = ssub.s32 %s22, 2
        // Predicated region
        $region69: #{tpu_custom_call.1} parent=67 // pred_check
          %p610 = pneg %p198
        $region70: #{tpu_custom_call.1} parent=67 // pred_check_branch
          %612 = sbr.rel (%p610) target = $region72
        $region71: #{tpu_custom_call.1} parent=67 // pred_region
          %s613 = sand.u32 %s183, 1
          %s614 = scalar_lea.sflag [#allocation9], %s613
          %s615 = sand.u32 %s183, 1
          %s616 = smul.addr %s615, 8
          %s617 = scalar_lea.vmem [#allocation13], %s616
          %618 = dma.done %s614, 128
        $region72: #{tpu_custom_call.1} parent=67 // pred_fallthru
          _
      $region68: #{tpu_custom_call.1} parent=5 // pred_fallthru
        _
    $region6: #{tpu_custom_call.1} parent=1 // loop_footer
      %s26 = sadd.s32 1, %s22
    $region7: #{tpu_custom_call.1} parent=1 // loop_footer_branch
      %21 = sbr.rel target = $region3
    $region8: #{tpu_custom_call.1} parent=1 // loop_exit
      _
    %619 = vsyncpa [#allocation8], 1
    %s620 = scalar_lea.sflag [#allocation8], 1
    %621 = vsyncpa %s620, 1
    %622 = vsyncpa [#allocation11], 1
    %s623 = scalar_lea.sflag [#allocation11], 1
    %624 = vsyncpa %s623, 1
    %625 = vsyncpa [#allocation9], 1
    %s626 = scalar_lea.sflag [#allocation9], 1
    %627 = vsyncpa %s626, 1

</llo_original>
